<compile_context>
chip_gen: v6e
topology: v6e:2x2x1
jax: 0.10.0
libtpu: 0.0.40
codegen_flags: <defaults>
</compile_context>

<pallas_src>
import functools

import jax
import jax.numpy as jnp
from jax.experimental import pallas as pl
from jax.experimental.pallas import tpu as pltpu

_SQRT_HALF = 0.7071067811865476  # 1/sqrt(2)


def _round_up(n, m):
    return ((n + m - 1) // m) * m


def _adapter_kernel(x_ref, wd_ref, bd_ref, wu_ref, bu_ref, s_ref, o_ref, *,
                    approximate_gelu):
    # x_ref:  (tm, D)   current tile of tokens (native dtype)
    # wd_ref: (D, Fp)   down-projection weight (pre-transposed, F lane-padded)
    # bd_ref: (1, Fp)   down bias (f32)
    # wu_ref: (Fp, D)   up-projection weight (pre-transposed)
    # bu_ref: (1, D)    up bias (f32)
    # s_ref:  (1,)      adapter scalar, in SMEM
    x = x_ref[...]

    # down(x): native-dtype MXU matmul (bf16 stays bf16), f32 accumulation.
    h = jnp.dot(x, wd_ref[...], preferred_element_type=jnp.float32)
    h = h + bd_ref[...]

    if approximate_gelu:
        # tanh GELU -> EUP slot (use when bit-parity with F.gelu not required).
        g = jax.nn.gelu(h, approximate=True)
    else:
        # Exact (erf) GELU to match PyTorch F.gelu default.
        g = 0.5 * h * (1.0 + jax.lax.erf(h * _SQRT_HALF))

    # Scale on the small (tm, Fp) activation instead of the (tm, D) output:
    #   x + s*(g @ Wu + bu) == x + (s*g) @ Wu + s*bu
    s = s_ref[0]
    g = (s * g).astype(wu_ref.dtype)

    u = jnp.dot(g, wu_ref[...], preferred_element_type=jnp.float32)
    u = u + s * bu_ref[...]

    o_ref[...] = (x.astype(jnp.float32) + u).astype(o_ref.dtype)


def prepare_adapter_params(w_down, b_down, w_up, b_up, *, compute_dtype=None):
    """One-time parameter prep -- call OUTSIDE the per-step hot path.

    PyTorch layout in:
        w_down: (ffn_num, in_features), b_down: (ffn_num,)
        w_up:   (in_features, ffn_num), b_up:   (in_features,)
    Returns (wd_t, bd, wu_t, bu): weights transposed to (D,F)/(F,D) with F
    zero-padded to a multiple of 128 (exact: gelu(0)=0, padded rows/cols are
    0), biases stored in f32.  `compute_dtype` (e.g. jnp.bfloat16) casts the
    weights for a low-precision MXU path.
    """
    w_down = jnp.asarray(w_down)
    w_up = jnp.asarray(w_up)
    if compute_dtype is not None:
        w_down = w_down.astype(compute_dtype)
        w_up = w_up.astype(compute_dtype)
    F, D = w_down.shape
    Fp = _round_up(F, 128)
    wd_t = jnp.pad(w_down.T, ((0, 0), (0, Fp - F)))                       # (D, Fp)
    bd = jnp.pad(jnp.asarray(b_down, jnp.float32).reshape(1, F),
                 ((0, 0), (0, Fp - F)))                                   # (1, Fp) f32
    wu_t = jnp.pad(w_up.T, ((0, Fp - F), (0, 0)))                         # (Fp, D)
    bu = jnp.asarray(b_up, jnp.float32).reshape(1, D)                     # (1, D)  f32
    return wd_t, bd, wu_t, bu


def _vmem_tuning():
    """Generation-aware (budget, vmem_limit) in bytes."""
    phys = None
    try:
        phys = pltpu.get_tpu_info().vmem_capacity_bytes
    except Exception:
        phys = None
    if phys is None:
        phys = 64 << 20  # be conservative (assume v7x-class 64 MiB/TC)
    if phys >= (100 << 20):          # v5e / v6e: 128 MiB physical VMEM
        return 64 << 20, 100 << 20
    return 28 << 20, 48 << 20        # v7x: 64 MiB per TensorCore


def _pick_tm(M, D, Fp, x_itemsize, w_itemsize, vmem_budget_bytes):
    """Largest row tile (<=1024) whose footprint fits the VMEM budget."""
    # Resident, single-buffered weights + f32 biases.
    weight_bytes = 2 * D * Fp * w_itemsize + 4 * (Fp + D)
    # Per-row footprint:
    #   x-in + out tiles, double buffered                  : 2 * 2 * D * itemsize
    #   f32 intermediates h, g                             : 2 * 4 * Fp
    #   g recast to weight dtype (MXU feed)                : Fp * w_itemsize
    #   f32 u + f32 cast of x (residual add)               : 2 * 4 * D
    per_row = 4 * D * x_itemsize + 8 * Fp + Fp * w_itemsize + 8 * D
    avail = max(vmem_budget_bytes - weight_bytes, 0)
    tm = int(avail // max(per_row, 1))
    snap = 16 if x_itemsize < 4 else 8
    if tm < snap:
        # TODO(synk): K-tile over Fp with an 'arbitrary' accumulator grid axis
        # for adapters whose resident weights alone approach the VMEM budget.
        tm = snap
    tm = min(1024, (tm // snap) * snap)
    return min(tm, _round_up(M, snap))


def adapter_forward(x, wd_t, bd, wu_t, bu, scalar=1.0, *, tm=None,
                    donate_x=False, compute_dtype=None,
                    approximate_gelu=False, vmem_limit_bytes=None):
    """x: (..., in_features).  wd_t/bd/wu_t/bu from prepare_adapter_params."""
    orig_shape = x.shape
    D = orig_shape[-1]
    Dw, Fp = wd_t.shape
    assert Dw == D and wu_t.shape == (Fp, D), \
        "weights must come from prepare_adapter_params for this in_features"

    if compute_dtype is not None:
        x = x.astype(compute_dtype)   # halves dominant HBM bytes (x in + out)
    x2 = x.reshape(-1, D)
    M = x2.shape[0]

    budget, limit = _vmem_tuning()
    if vmem_limit_bytes is None:
        vmem_limit_bytes = limit
    if tm is None:
        tm = _pick_tm(M, D, Fp, jnp.dtype(x2.dtype).itemsize,
                      jnp.dtype(wd_t.dtype).itemsize, budget)
    grid = (pl.cdiv(M, tm),)

    scalar_arr = jnp.asarray(scalar, jnp.float32).reshape((1,))

    # Note: aliasing is only a free win if the caller also donates x at the
    # jit boundary; otherwise XLA inserts a defensive copy.
    io_aliases = {0: 0} if donate_x else {}

    resident = pl.Buffered(1)   # constant index_map -> second buffer is waste

    out2 = pl.pallas_call(
        functools.partial(_adapter_kernel, approximate_gelu=approximate_gelu),
        out_shape=jax.ShapeDtypeStruct((M, D), x2.dtype),
        grid_spec=pltpu.PrefetchScalarGridSpec(
            num_scalar_prefetch=0,
            grid=grid,
            in_specs=[
                pl.BlockSpec((tm, D), lambda i: (i, 0)),                    # x tile
                pl.BlockSpec((D, Fp), lambda i: (0, 0),
                             pipeline_mode=resident),                       # W_down^T
                pl.BlockSpec((1, Fp), lambda i: (0, 0),
                             pipeline_mode=resident),                       # b_down
                pl.BlockSpec((Fp, D), lambda i: (0, 0),
                             pipeline_mode=resident),                       # W_up^T
                pl.BlockSpec((1, D), lambda i: (0, 0),
                             pipeline_mode=resident),                       # b_up
                pl.BlockSpec(memory_space=pltpu.MemorySpace.SMEM),          # scalar
            ],
            out_specs=pl.BlockSpec((tm, D), lambda i: (i, 0)),
        ),
        compiler_params=pltpu.CompilerParams(
            dimension_semantics=("parallel",),
            vmem_limit_bytes=vmem_limit_bytes,
        ),
        input_output_aliases=io_aliases,
    )(x2, wd_t, bd, wu_t, bu, scalar_arr)

    return out2.reshape(orig_shape)


def _reference(x, w_down, b_down, w_up, b_up, scalar):
    h = jnp.einsum("...d,fd->...f", x, w_down) + b_down
    g = jax.nn.gelu(h, approximate=False)
    u = jnp.einsum("...f,df->...d", g, w_up) + b_up
    return x + scalar * u


def _make_params(key, in_features, ffn_num):
    kwd, kbd, kwu, kbu = jax.random.split(key, 4)
    lim_d = 1.0 / (in_features ** 0.5)
    lim_u = 1.0 / (ffn_num ** 0.5)
    w_down = jax.random.uniform(kwd, (ffn_num, in_features), jnp.float32, -lim_d, lim_d)
    b_down = jax.random.uniform(kbd, (ffn_num,), jnp.float32, -lim_d, lim_d)
    w_up = jax.random.uniform(kwu, (in_features, ffn_num), jnp.float32, -lim_u, lim_u)
    b_up = jax.random.uniform(kbu, (in_features,), jnp.float32, -lim_u, lim_u)
    return w_down, b_down, w_up, b_up


if __name__ == "__main__":
    key = jax.random.PRNGKey(0)
    k1, k2, k3, k4 = jax.random.split(key, 4)

    # --- Case 1: module-default shapes (B=2, S=8, in_features=32, ffn_num=32) ---
    B, S, in_features, ffn_num, scalar = 2, 8, 32, 32, 1.0
    x = jax.random.normal(k1, (B, S, in_features), dtype=jnp.float32)
    w_down, b_down, w_up, b_up = _make_params(k2, in_features, ffn_num)
    params = prepare_adapter_params(w_down, b_down, w_up, b_up)

    fwd = jax.jit(adapter_forward)
    out = jax.block_until_ready(fwd(x, *params, scalar))
    ref = _reference(x, w_down, b_down, w_up, b_up, scalar)
    assert out.shape == x.shape
    err1 = float(jnp.max(jnp.abs(out - ref)))
    assert jnp.allclose(out, ref, atol=1e-5, rtol=1e-5), err1

    # --- Case 2: multi-tile grid, partial last tile, D not a multiple of 128,
    #             padded F, explicit tm (exercises the tiled / masked-vst path) ---
    B2, S2, in2, ffn2, scalar2 = 4, 250, 100, 96, 0.5
    x2 = jax.random.normal(k3, (B2, S2, in2), dtype=jnp.float32)
    w_down2, b_down2, w_up2, b_up2 = _make_params(k4, in2, ffn2)
    params2 = prepare_adapter_params(w_down2, b_down2, w_up2, b_up2)

    fwd2 = jax.jit(functools.partial(adapter_forward, tm=128))
    out2 = jax.block_until_ready(fwd2(x2, *params2, scalar2))
    ref2 = _reference(x2, w_down2, b_down2, w_up2, b_up2, scalar2)
    assert out2.shape == x2.shape
    err2 = float(jnp.max(jnp.abs(out2 - ref2)))
    assert jnp.allclose(out2, ref2, atol=1e-4, rtol=1e-4), err2

    print("KERNEL_OK")
</pallas_src>

<mosaic_0001>
module attributes {stable_mosaic.version = 11 : i64} {
  func.func @_adapter_kernel(%arg0: i32, %arg1: memref<16x32xf32, #tpu.memory_space<vmem>>, %arg2: memref<32x128xf32, #tpu.memory_space<vmem>>, %arg3: memref<1x128xf32, #tpu.memory_space<vmem>>, %arg4: memref<128x32xf32, #tpu.memory_space<vmem>>, %arg5: memref<1x32xf32, #tpu.memory_space<vmem>>, %arg6: memref<1xf32, #tpu.memory_space<smem>>, %arg7: memref<16x32xf32, #tpu.memory_space<vmem>>) attributes {dimension_semantics = [#tpu.dimension_semantics<parallel>], iteration_bounds = array<i64: 1>, scalar_prefetch = 0 : i64, scratch_operands = 0 : i64, tpu.core_type = #tpu.core_type<tc>, window_params = [{transform_indices = @transform_0, window_bounds = array<i64: 16, 32>}, {pipeline_mode = #tpu.pipeline_mode<synchronous>, transform_indices = @transform_1, window_bounds = array<i64: 32, 128>}, {pipeline_mode = #tpu.pipeline_mode<synchronous>, transform_indices = @transform_2, window_bounds = array<i64: 1, 128>}, {pipeline_mode = #tpu.pipeline_mode<synchronous>, transform_indices = @transform_3, window_bounds = array<i64: 128, 32>}, {pipeline_mode = #tpu.pipeline_mode<synchronous>, transform_indices = @transform_4, window_bounds = array<i64: 1, 32>}, {transform_indices = @transform_5, window_bounds = array<i64: 1>}, {transform_indices = @transform_6, window_bounds = array<i64: 16, 32>}]} {
    %c0 = arith.constant 0 : index
    %c0_0 = arith.constant 0 : index
    %0 = vector.load %arg1[%c0, %c0_0] : memref<16x32xf32, #tpu.memory_space<vmem>>, vector<16x32xf32>
    %c0_1 = arith.constant 0 : index
    %c0_2 = arith.constant 0 : index
    %1 = vector.load %arg2[%c0_1, %c0_2] : memref<32x128xf32, #tpu.memory_space<vmem>>, vector<32x128xf32>
    %cst = arith.constant dense<0.000000e+00> : vector<16x128xf32>
    %2 = tpu.matmul %0, %1, %cst {dimension_numbers = #tpu.dot_dimension_numbers<[1], [0], [0], [1], [0, 0, 1, 1], [], []>} : vector<16x32xf32>, vector<32x128xf32>, vector<16x128xf32> -> vector<16x128xf32>
    %c0_3 = arith.constant 0 : index
    %c0_4 = arith.constant 0 : index
    %3 = vector.load %arg3[%c0_3, %c0_4] : memref<1x128xf32, #tpu.memory_space<vmem>>, vector<1x128xf32>
    %4 = vector.broadcast %3 : vector<1x128xf32> to vector<16x128xf32>
    %5 = arith.addf %2, %4 : vector<16x128xf32>
    %cst_5 = arith.constant 5.000000e-01 : f32
    %6 = vector.broadcast %cst_5 : f32 to vector<16x128xf32>
    %7 = arith.mulf %6, %5 : vector<16x128xf32>
    %cst_6 = arith.constant 0.707106769 : f32
    %8 = vector.broadcast %cst_6 : f32 to vector<16x128xf32>
    %9 = arith.mulf %5, %8 : vector<16x128xf32>
    %10 = math.erf %9 : vector<16x128xf32>
    %cst_7 = arith.constant 1.000000e+00 : f32
    %11 = vector.broadcast %cst_7 : f32 to vector<16x128xf32>
    %12 = arith.addf %11, %10 : vector<16x128xf32>
    %13 = arith.mulf %7, %12 : vector<16x128xf32>
    %c0_8 = arith.constant 0 : index
    %14 = memref.load %arg6[%c0_8] : memref<1xf32, #tpu.memory_space<smem>>
    %15 = vector.broadcast %14 : f32 to vector<16x128xf32>
    %16 = arith.mulf %15, %13 : vector<16x128xf32>
    %c0_9 = arith.constant 0 : index
    %c0_10 = arith.constant 0 : index
    %17 = vector.load %arg4[%c0_9, %c0_10] : memref<128x32xf32, #tpu.memory_space<vmem>>, vector<128x32xf32>
    %cst_11 = arith.constant dense<0.000000e+00> : vector<16x32xf32>
    %18 = tpu.matmul %16, %17, %cst_11 {dimension_numbers = #tpu.dot_dimension_numbers<[1], [0], [0], [1], [0, 0, 1, 1], [], []>} : vector<16x128xf32>, vector<128x32xf32>, vector<16x32xf32> -> vector<16x32xf32>
    %c0_12 = arith.constant 0 : index
    %c0_13 = arith.constant 0 : index
    %19 = vector.load %arg5[%c0_12, %c0_13] : memref<1x32xf32, #tpu.memory_space<vmem>>, vector<1x32xf32>
    %20 = vector.broadcast %14 : f32 to vector<1x32xf32>
    %21 = arith.mulf %20, %19 : vector<1x32xf32>
    %22 = vector.broadcast %21 : vector<1x32xf32> to vector<16x32xf32>
    %23 = arith.addf %18, %22 : vector<16x32xf32>
    %24 = arith.addf %0, %23 : vector<16x32xf32>
    %c0_14 = arith.constant 0 : index
    %c0_15 = arith.constant 0 : index
    %25 = vector.load %arg7[%c0_14, %c0_15] : memref<16x32xf32, #tpu.memory_space<vmem>>, vector<16x32xf32>
    tpu.vector_store %arg7[%c0_14, %c0_15], %24 {strides = array<i32>} : memref<16x32xf32, #tpu.memory_space<vmem>>, vector<16x32xf32>,
    return
  }
  func.func @transform_0(%arg0: i32) -> (i32, i32) {
    %c0_i32 = arith.constant 0 : i32
    %c0_i32_0 = arith.constant 0 : i32
    return %arg0, %c0_i32 : i32, i32
  }
  func.func @transform_1(%arg0: i32) -> (i32, i32) {
    %c0_i32 = arith.constant 0 : i32
    %c0_i32_0 = arith.constant 0 : i32
    %c0_i32_1 = arith.constant 0 : i32
    return %c0_i32, %c0_i32_0 : i32, i32
  }
  func.func @transform_2(%arg0: i32) -> (i32, i32) {
    %c0_i32 = arith.constant 0 : i32
    %c0_i32_0 = arith.constant 0 : i32
    %c0_i32_1 = arith.constant 0 : i32
    return %c0_i32, %c0_i32_0 : i32, i32
  }
  func.func @transform_3(%arg0: i32) -> (i32, i32) {
    %c0_i32 = arith.constant 0 : i32
    %c0_i32_0 = arith.constant 0 : i32
    %c0_i32_1 = arith.constant 0 : i32
    return %c0_i32, %c0_i32_0 : i32, i32
  }
  func.func @transform_4(%arg0: i32) -> (i32, i32) {
    %c0_i32 = arith.constant 0 : i32
    %c0_i32_0 = arith.constant 0 : i32
    %c0_i32_1 = arith.constant 0 : i32
    return %c0_i32, %c0_i32_0 : i32, i32
  }
  func.func @transform_5(%arg0: i32) -> i32 {
    %c0_i32 = arith.constant 0 : i32
    %c0_i32_0 = arith.constant 0 : i32
    return %c0_i32 : i32
  }
  func.func @transform_6(%arg0: i32) -> (i32, i32) {
    %c0_i32 = arith.constant 0 : i32
    %c0_i32_0 = arith.constant 0 : i32
    return %arg0, %c0_i32 : i32, i32
  }
}

</mosaic_0001>

<llo_original>
// kernel: adapter_forward.1
$region0: #{adapter_forward.1}
  #allocation0 [shape = 'u32[]', space=smem, size = 0x4, offset = 0x4, fixed_abs, tag = 'smem constant byte address 0x4 - core index']
  #allocation1 [shape = 'u32[144,128]{1,0:T(1,128)}', space=vmem, size = 0x12000, scoped, tag = 'internal scratch']
  #allocation2 [shape = 'f32[1]{0:T(128)S(6)}', space=smem, size = 0x200, scoped, tag = 'scoped memory for adapter_forward.1']
  %s0 = inlined_call_operand.vmem [shape: f32[16,32], index: 0, kind: input, shape index: {}]
  %s1 = inlined_call_operand.vmem [shape: f32[32,128], index: 1, kind: input, shape index: {}]
  %s2 = inlined_call_operand.vmem [shape: f32[1,128], index: 2, kind: input, shape index: {}]
  %s3 = inlined_call_operand.vmem [shape: f32[128,32], index: 3, kind: input, shape index: {}]
  %s4 = inlined_call_operand.vmem [shape: f32[1,32], index: 4, kind: input, shape index: {}]
  %s5 = inlined_call_operand.<no memory space> [shape: f32[1], index: 5, kind: input, shape index: {}]
  %s6 = inlined_call_operand.hbm [shape: f32[16,32], index: 6, kind: output, shape index: {}]
  %s7 = sld [smem:[#allocation0]]
  $region34: #{adapter_forward.1} parent=0
    _
  %s9 = ssub.s32 1, %s7
  %s10 = scalar_select 0, %s9, %s7
  %11 = sst [smem:[#allocation2]] %s5
  $region1: #{adapter_forward.1} parent=0
    #allocation3 [shape = 'u8[8192]{0}', space=vmem, size = 0x2000, scoped, tag = 'output window, operand 0, single buffered']
    #allocation4 [shape = 's32[1]{0}', space=sflag, size = 0x4, scoped, tag = 'scoped memory for adapter_forward.1']
    %12 = vsyncpa [#allocation4], 0
    // Predicated region
    $region2: #{adapter_forward.1} parent=1 // pred_check
      _
    $region3: #{adapter_forward.1} parent=1 // pred_check_branch
      %14 = sbr.rel (0) target = $region5
    $region4: #{adapter_forward.1} parent=1 // pred_region
      _
    $region5: #{adapter_forward.1} parent=1 // pred_fallthru
      _
    // Predicated region
    $region6: #{adapter_forward.1} parent=1 // pred_check
      _
    $region7: #{adapter_forward.1} parent=1 // pred_check_branch
      %16 = sbr.rel (0) target = $region9
    $region8: #{adapter_forward.1} parent=1 // pred_region
      _
    $region9: #{adapter_forward.1} parent=1 // pred_fallthru
      _
    // Predicated region
    $region10: #{adapter_forward.1} parent=1 // pred_check
      _
    $region11: #{adapter_forward.1} parent=1 // pred_check_branch
      %18 = sbr.rel (0) target = $region13
    $region12: #{adapter_forward.1} parent=1 // pred_region
      _
    $region13: #{adapter_forward.1} parent=1 // pred_fallthru
      _
    // Predicated region
    $region14: #{adapter_forward.1} parent=1 // pred_check
      _
    $region15: #{adapter_forward.1} parent=1 // pred_check_branch
      %20 = sbr.rel (0) target = $region17
    $region16: #{adapter_forward.1} parent=1 // pred_region
      _
    $region17: #{adapter_forward.1} parent=1 // pred_fallthru
      _
    // Predicated region
    $region18: #{adapter_forward.1} parent=1 // pred_check
      _
    $region19: #{adapter_forward.1} parent=1 // pred_check_branch
      %22 = sbr.rel (0) target = $region21
    $region20: #{adapter_forward.1} parent=1 // pred_region
      _
    $region21: #{adapter_forward.1} parent=1 // pred_fallthru
      _
    // Predicated region
    $region22: #{adapter_forward.1} parent=1 // pred_check
      _
    $region23: #{adapter_forward.1} parent=1 // pred_check_branch
      %24 = sbr.rel (0) target = $region25
    $region24: #{adapter_forward.1} parent=1 // pred_region
      _
    $region25: #{adapter_forward.1} parent=1 // pred_fallthru
      _
    %v25 = vld [vmem:[%s0] sm:$0xff]
    %v26 = vld [vmem:[%s0 + $0x8] sm:$0xff]
    %v27 = vld [vmem:[%s1] sm:$0xff]
    %v28 = vld [vmem:[%s1 + $0x8] sm:$0xff]
    %v29 = vld [vmem:[%s1 + $0x10] sm:$0xff]
    %v30 = vld [vmem:[%s1 + $0x18] sm:$0xff]
    %v31 = vld [vmem:[%s2] sm:$0x1]
    %v33 = vlaneseq
    %v34 = vshrl.u32 %v33, 7
    %v35 = vsub.s32 0, %v34
    %v36 = vrot.slane %v31, %v35
    %vm38 = vcmask 261120
    %v40 = vsel %vm38, %v25, 0
    %v43 = vsel %vm38, %v26, 0
    %45 = vmatprep.subr.mxu0 0.0
    %46 = vmatpush1.msra.mxu0 0.0
    %47 = vmatprep.subr.mxu0 0.0
    %48 = vmatpush1.msra.mxu0 0.0
    %49 = vmatprep.subr.mxu0 0.0
    %50 = vmatpush1.msra.mxu0 0.0
    %51 = vmatprep.subr.mxu0 0.0
    %52 = vmatpush1.msra.mxu0 0.0
    %53 = vmatprep.subr.mxu0 0.0
    %54 = vmatpush1.msra.mxu0 0.0
    %55 = vmatprep.subr.mxu0 0.0
    %56 = vmatpush1.msra.mxu0 0.0
    %57 = vmatprep.subr.mxu0 0.0
    %58 = vmatpush1.msra.mxu0 0.0
    %59 = vmatprep.subr.mxu0 0.0
    %60 = vmatpush1.msra.mxu0 0.0
    %61 = vmatprep.subr.mxu0 0.0
    %62 = vmatpush1.msra.mxu0 0.0
    %63 = vmatprep.subr.mxu0 0.0
    %64 = vmatpush1.msra.mxu0 0.0
    %65 = vmatprep.subr.mxu0 0.0
    %66 = vmatpush1.msra.mxu0 0.0
    %67 = vmatprep.subr.mxu0 0.0
    %68 = vmatpush1.msra.mxu0 0.0
    %69 = vmatprep.subr.mxu0 0.0
    %70 = vmatpush1.msra.mxu0 %v30
    %71 = vmatprep.subr.mxu0 0.0
    %72 = vmatpush1.msra.mxu0 %v29
    %73 = vmatprep.subr.mxu0 0.0
    %74 = vmatpush1.msra.mxu0 %v28
    %75 = vmatprep.subr.mxu0 0.0
    %76 = vmatpush1.msra.mxu0 %v27
    %77 = vmatprep.subr.mxu0 0.0
    %78 = vmatpush2.msra.mxu0 0.0
    %79 = vmatprep.subr.mxu0 0.0
    %80 = vmatpush2.msra.mxu0 0.0
    %81 = vmatprep.subr.mxu0 0.0
    %82 = vmatpush2.msra.mxu0 0.0
    %83 = vmatprep.subr.mxu0 0.0
    %84 = vmatpush2.msra.mxu0 0.0
    %85 = vmatprep.subr.mxu0 0.0
    %86 = vmatpush2.msra.mxu0 0.0
    %87 = vmatprep.subr.mxu0 0.0
    %88 = vmatpush2.msra.mxu0 0.0
    %89 = vmatprep.subr.mxu0 0.0
    %90 = vmatpush2.msra.mxu0 0.0
    %91 = vmatprep.subr.mxu0 0.0
    %92 = vmatpush2.msra.mxu0 0.0
    %93 = vmatprep.subr.mxu0 0.0
    %94 = vmatpush2.msra.mxu0 0.0
    %95 = vmatprep.subr.mxu0 0.0
    %96 = vmatpush2.msra.mxu0 0.0
    %97 = vmatprep.subr.mxu0 0.0
    %98 = vmatpush2.msra.mxu0 0.0
    %99 = vmatprep.subr.mxu0 0.0
    %100 = vmatpush2.msra.mxu0 0.0
    %101 = vmatprep.subr.mxu0 0.0
    %102 = vmatpush2.msra.mxu0 0.0
    %103 = vmatprep.subr.mxu0 0.0
    %104 = vmatpush2.msra.mxu0 0.0
    %105 = vmatprep.subr.mxu0 0.0
    %106 = vmatpush2.msra.mxu0 0.0
    %107 = vmatprep.subr.mxu0 0.0
    %108 = vmatpush2.msra.mxu0 0.0
    %109 = vmatprep.mubr.f32.mxu0 0.0
    %110 = vmatmul.mubr.f32.gmra.mxu0 %v40
    %v111 = vpop.f32.mrf.mxu0
    %v112 = vadd.f32 %v36, %v111
    %v113 = vpop.f32.mrf.mxu0
    %114 = vmatprep.mubr.f32.mxu0 0.0
    %115 = vmatmul.mubr.f32.gmra.mxu0 %v43
    %v116 = vpop.f32.mrf.mxu0
    %v117 = vadd.f32 %v36, %v116
    %v118 = vpop.f32.mrf.mxu0
    %119 = vdwg.mxu0
    %v120 = vmul.f32 %v112, 0.5
    %v121 = vmul.f32 %v117, 0.5
    %v122 = vmul.f32 %v112, 0.70710677
    %v123 = vmul.f32 %v117, 0.70710677
    %v124 = verf.f32.pop %v122
    %v125 = verf.f32.pop %v123
    %v126 = vadd.f32 %v124, 1.0
    %v127 = vadd.f32 %v125, 1.0
    %v128 = vmul.f32 %v120, %v126
    %v129 = vmul.f32 %v121, %v127
    %s130 = sld [smem:[#allocation2]]
    %v131 = vstv %s130
    %v132 = vmul.f32 %v131, %v128
    %v133 = vmul.f32 %v131, %v129
    %v134 = vld [vmem:[%s3] sm:$0xff]
    %v135 = vld [vmem:[%s3 + $0x8] sm:$0xff]
    %v136 = vld [vmem:[%s3 + $0x10] sm:$0xff]
    %v137 = vld [vmem:[%s3 + $0x18] sm:$0xff]
    %v138 = vld [vmem:[%s3 + $0x20] sm:$0xff]
    %v139 = vld [vmem:[%s3 + $0x28] sm:$0xff]
    %v140 = vld [vmem:[%s3 + $0x30] sm:$0xff]
    %v141 = vld [vmem:[%s3 + $0x38] sm:$0xff]
    %v142 = vld [vmem:[%s3 + $0x40] sm:$0xff]
    %v143 = vld [vmem:[%s3 + $0x48] sm:$0xff]
    %v144 = vld [vmem:[%s3 + $0x50] sm:$0xff]
    %v145 = vld [vmem:[%s3 + $0x58] sm:$0xff]
    %v146 = vld [vmem:[%s3 + $0x60] sm:$0xff]
    %v147 = vld [vmem:[%s3 + $0x68] sm:$0xff]
    %v148 = vld [vmem:[%s3 + $0x70] sm:$0xff]
    %v149 = vld [vmem:[%s3 + $0x78] sm:$0xff]
    %v150 = vld [vmem:[%s4] sm:$0x1]
    %v151 = vmul.f32 %v131, %v150
    %v153 = vlaneseq
    %v154 = vshrl.u32 %v153, 7
    %v155 = vsub.s32 0, %v154
    %v156 = vrot.slane %v151, %v155
    %158 = vmatprep.subr.mxu0 0.0
    %159 = vmatpush1.msra.mxu0 %v149
    %160 = vmatprep.subr.mxu0 0.0
    %161 = vmatpush1.msra.mxu0 %v148
    %162 = vmatprep.subr.mxu0 0.0
    %163 = vmatpush1.msra.mxu0 %v147
    %164 = vmatprep.subr.mxu0 0.0
    %165 = vmatpush1.msra.mxu0 %v146
    %166 = vmatprep.subr.mxu0 0.0
    %167 = vmatpush1.msra.mxu0 %v145
    %168 = vmatprep.subr.mxu0 0.0
    %169 = vmatpush1.msra.mxu0 %v144
    %170 = vmatprep.subr.mxu0 0.0
    %171 = vmatpush1.msra.mxu0 %v143
    %172 = vmatprep.subr.mxu0 0.0
    %173 = vmatpush1.msra.mxu0 %v142
    %174 = vmatprep.subr.mxu0 0.0
    %175 = vmatpush1.msra.mxu0 %v141
    %176 = vmatprep.subr.mxu0 0.0
    %177 = vmatpush1.msra.mxu0 %v140
    %178 = vmatprep.subr.mxu0 0.0
    %179 = vmatpush1.msra.mxu0 %v139
    %180 = vmatprep.subr.mxu0 0.0
    %181 = vmatpush1.msra.mxu0 %v138
    %182 = vmatprep.subr.mxu0 0.0
    %183 = vmatpush1.msra.mxu0 %v137
    %184 = vmatprep.subr.mxu0 0.0
    %185 = vmatpush1.msra.mxu0 %v136
    %186 = vmatprep.subr.mxu0 0.0
    %187 = vmatpush1.msra.mxu0 %v135
    %188 = vmatprep.subr.mxu0 0.0
    %189 = vmatpush1.msra.mxu0 %v134
    %190 = vmatprep.subr.mxu0 0.0
    %191 = vmatpush2.msra.mxu0 0.0
    %192 = vmatprep.subr.mxu0 0.0
    %193 = vmatpush2.msra.mxu0 0.0
    %194 = vmatprep.subr.mxu0 0.0
    %195 = vmatpush2.msra.mxu0 0.0
    %196 = vmatprep.subr.mxu0 0.0
    %197 = vmatpush2.msra.mxu0 0.0
    %198 = vmatprep.subr.mxu0 0.0
    %199 = vmatpush2.msra.mxu0 0.0
    %200 = vmatprep.subr.mxu0 0.0
    %201 = vmatpush2.msra.mxu0 0.0
    %202 = vmatprep.subr.mxu0 0.0
    %203 = vmatpush2.msra.mxu0 0.0
    %204 = vmatprep.subr.mxu0 0.0
    %205 = vmatpush2.msra.mxu0 0.0
    %206 = vmatprep.subr.mxu0 0.0
    %207 = vmatpush2.msra.mxu0 0.0
    %208 = vmatprep.subr.mxu0 0.0
    %209 = vmatpush2.msra.mxu0 0.0
    %210 = vmatprep.subr.mxu0 0.0
    %211 = vmatpush2.msra.mxu0 0.0
    %212 = vmatprep.subr.mxu0 0.0
    %213 = vmatpush2.msra.mxu0 0.0
    %214 = vmatprep.subr.mxu0 0.0
    %215 = vmatpush2.msra.mxu0 0.0
    %216 = vmatprep.subr.mxu0 0.0
    %217 = vmatpush2.msra.mxu0 0.0
    %218 = vmatprep.subr.mxu0 0.0
    %219 = vmatpush2.msra.mxu0 0.0
    %220 = vmatprep.subr.mxu0 0.0
    %221 = vmatpush2.msra.mxu0 0.0
    %222 = vmatprep.mubr.f32.mxu0 0.0
    %223 = vmatmul.mubr.f32.gmra.mxu0 %v132
    %v224 = vpop.f32.mrf.mxu0
    %v225 = vadd.f32 %v156, %v224
    %v226 = vpop.f32.mrf.mxu0
    %227 = vmatprep.mubr.f32.mxu0 0.0
    %228 = vmatmul.mubr.f32.gmra.mxu0 %v133
    %v229 = vpop.f32.mrf.mxu0
    %v230 = vadd.f32 %v156, %v229
    %v231 = vpop.f32.mrf.mxu0
    %232 = vdwg.mxu0
    %v233 = vadd.f32 %v25, %v225
    %v234 = vadd.f32 %v26, %v230
    %235 = vst.msk [vmem:[#allocation3] sm:$0xff] %vm38, %v233
    %236 = vst.msk [vmem:[#allocation3 + $0x8] sm:$0xff] %vm38, %v234
    // Predicated region
    $region26: #{adapter_forward.1} parent=1 // pred_check
      _
    $region27: #{adapter_forward.1} parent=1 // pred_check_branch
      %238 = sbr.rel (0) target = $region29
    $region28: #{adapter_forward.1} parent=1 // pred_region
      %s240 = ssub.s32 256, 256
      %241 = vsyncadd [#allocation4], %s240
      %s242 = sshll.u32 [#allocation3], 4
      %s243 = int_to_ptr.vmem [resolvable:$true] %s242
      %248 = dma.vmem_to_hbm [thread:$0]  %s243, 256, %s6, [#allocation4], 128, 128, 8
    $region29: #{adapter_forward.1} parent=1 // pred_fallthru
      _
    // Predicated region
    $region30: #{adapter_forward.1} parent=1 // pred_check
      _
    $region31: #{adapter_forward.1} parent=1 // pred_check_branch
      %250 = sbr.rel (0) target = $region33
    $region32: #{adapter_forward.1} parent=1 // pred_region
      %251 = dma.done [#allocation4], 256
    $region33: #{adapter_forward.1} parent=1 // pred_fallthru
      _
    %252 = vsyncpa [#allocation4], 1

</llo_original>
